<compile_context>
chip_gen: v7x
topology: tpu7x:2x2x1
jax: 0.10.0
libtpu: 0.0.40
codegen_flags: <defaults>
</compile_context>

<pallas_src>
import jax
import jax.numpy as jnp
from jax.experimental import pallas as pl
from jax.experimental.pallas import tpu as pltpu


def _round_up(x, m):
    return (x + m - 1) // m * m


# --------------------------------------------------------------------------
# Phase 1: conv (matmul on the MXU) + per-tile per-channel sum / sum-of-squares
# --------------------------------------------------------------------------
def _conv_stats_kernel(p_ref, w_ref, y_ref, stats_ref):
    # p_ref: (TM, K) bf16, w_ref: (K, C_pad) bf16
    y = jnp.dot(p_ref[...], w_ref[...], preferred_element_type=jnp.float32)
    y_ref[...] = y
    s = jnp.sum(y, axis=0, keepdims=True)          # (1, C_pad)
    ss = jnp.sum(y * y, axis=0, keepdims=True)     # (1, C_pad)
    # Note: f32 sum/sumsq per tile; tiles are short (<=TM rows) so per-tile
    # partials are well conditioned before the cross-tile reduction.
    stats_ref[...] = jnp.concatenate([s, ss], axis=0).reshape(1, 2, s.shape[-1])


# --------------------------------------------------------------------------
# Phase 2: fused BatchNorm affine (one FMA) + ReLU
# --------------------------------------------------------------------------
def _bn_relu_kernel(y_ref, scale_ref, shift_ref, o_ref):
    o_ref[...] = jnp.maximum(y_ref[...] * scale_ref[...] + shift_ref[...], 0.0)


def _build_patches(x_nchw, kernel=3, dilation=2, stride=2, padding=2):
    """im2col on the even-subsampled padded input. Returns (M, C_in*9)."""
    n, c, h, w = x_nchw.shape
    h_out = (h + 2 * padding - dilation * (kernel - 1) - 1) // stride + 1
    w_out = (w + 2 * padding - dilation * (kernel - 1) - 1) // stride + 1
    # NHWC so tap slices are contiguous and no big transpose is needed later.
    x_nhwc = jnp.transpose(x_nchw, (0, 2, 3, 1))
    x_pad = jnp.pad(x_nhwc, ((0, 0), (padding, padding), (padding, padding), (0, 0)))
    # padded index touched = stride*h_out + dilation*kh = 2*(h_out + kh): even only.
    xe = x_pad[:, ::2, ::2, :][:, :h_out + 2, :w_out + 2, :]
    taps = [xe[:, kh:kh + h_out, kw:kw + w_out, :]
            for kh in range(kernel) for kw in range(kernel)]
    # (N, H_out, W_out, C, 9) with tap index kh*3+kw -> flatten matches the
    # PyTorch weight (out_ch, in_ch, 3, 3).reshape(out_ch, -1) ordering.
    patches = jnp.stack(taps, axis=-1)
    patches = patches.reshape(n * h_out * w_out, c * kernel * kernel)
    return patches, (n, h_out, w_out)


@jax.jit
def double_conv2_2(x_nchw, weight, bias, gamma, beta):
    """x: (N, C_in, H, W), weight: (C_out, C_in, 3, 3) -> (N, C_out, H_out, W_out)."""
    del bias  # exactly cancelled by the training-mode BN mean subtraction
    out_ch = weight.shape[0]
    c_pad = _round_up(max(out_ch, 128), 128)       # lane-dense stores / MXU N dim

    patches, (n, h_out, w_out) = _build_patches(x_nchw.astype(jnp.float32))
    m, k = patches.shape

    # Tile M; keep tiles a multiple of 8 sublanes.
    tm = 512 if m >= 512 else _round_up(m, 8)
    m_pad = _round_up(m, tm)
    t = m_pad // tm
    if m_pad != m:
        # zero rows contribute 0 to sum/sumsq (no bias), stats use the true M.
        patches = jnp.pad(patches, ((0, m_pad - m), (0, 0)))
    patches = patches.astype(jnp.bfloat16)         # halve matmul-operand DMA bytes

    w2d = weight.astype(jnp.float32).reshape(out_ch, k).T          # (K, C_out)
    w2d = jnp.pad(w2d, ((0, 0), (0, c_pad - out_ch))).astype(jnp.bfloat16)

    # ---- phase 1: conv + per-tile channel statistics -------------------------
    y_flat, part_stats = pl.pallas_call(
        _conv_stats_kernel,
        out_shape=(
            jax.ShapeDtypeStruct((m_pad, c_pad), jnp.float32),
            jax.ShapeDtypeStruct((t, 2, c_pad), jnp.float32),
        ),
        grid=(t,),
        in_specs=[
            pl.BlockSpec((tm, k), lambda i: (i, 0)),
            pl.BlockSpec((k, c_pad), lambda i: (0, 0)),
        ],
        out_specs=(
            pl.BlockSpec((tm, c_pad), lambda i: (i, 0)),
            pl.BlockSpec((1, 2, c_pad), lambda i: (i, 0, 0)),
        ),
        compiler_params=pltpu.CompilerParams(
            dimension_semantics=("parallel",)),
    )(patches, w2d)

    # ---- tiny JAX glue: global stats + folded BN affine ----------------------
    sums = jnp.sum(part_stats[:, 0, :], axis=0)
    sumsq = jnp.sum(part_stats[:, 1, :], axis=0)
    count = jnp.float32(m)
    mean = sums / count
    var = jnp.maximum(sumsq / count - mean * mean, 0.0)   # biased (training-mode)
    inv_std = jax.lax.rsqrt(var + 1e-5)
    gamma_p = jnp.pad(gamma.astype(jnp.float32), (0, c_pad - out_ch))
    beta_p = jnp.pad(beta.astype(jnp.float32), (0, c_pad - out_ch))
    scale = (gamma_p * inv_std).reshape(1, c_pad)
    shift = (beta_p - mean * gamma_p * inv_std).reshape(1, c_pad)

    # ---- phase 2: normalize + ReLU -------------------------------------------
    out_flat = pl.pallas_call(
        _bn_relu_kernel,
        out_shape=jax.ShapeDtypeStruct((m_pad, c_pad), jnp.float32),
        grid=(t,),
        in_specs=[
            pl.BlockSpec((tm, c_pad), lambda i: (i, 0)),
            pl.BlockSpec((1, c_pad), lambda i: (0, 0)),
            pl.BlockSpec((1, c_pad), lambda i: (0, 0)),
        ],
        out_specs=pl.BlockSpec((tm, c_pad), lambda i: (i, 0)),
        compiler_params=pltpu.CompilerParams(
            dimension_semantics=("parallel",)),
    )(y_flat, scale, shift)

    out = out_flat[:m, :out_ch].reshape(n, h_out, w_out, out_ch)   # NHWC
    # NHWC->NCHW only to match the PyTorch module contract; a consumer that
    # accepts NHWC could skip this pass.
    return jnp.transpose(out, (0, 3, 1, 2))


if __name__ == "__main__":
    key = jax.random.PRNGKey(0)
    k_x, k_w, k_b = jax.random.split(key, 3)

    in_ch, out_ch = 4, 8
    x = jax.random.normal(k_x, (2, in_ch, 16, 16), dtype=jnp.float32)

    # Deterministic synthetic parameters (shapes from nn.Conv2d / nn.BatchNorm2d).
    weight = jax.random.normal(k_w, (out_ch, in_ch, 3, 3), dtype=jnp.float32) * 0.1
    bias = jax.random.normal(k_b, (out_ch,), dtype=jnp.float32) * 0.1
    gamma = jnp.ones((out_ch,), dtype=jnp.float32)   # BatchNorm2d default weight
    beta = jnp.zeros((out_ch,), dtype=jnp.float32)   # BatchNorm2d default bias

    y = double_conv2_2(x, weight, bias, gamma, beta)
    jax.block_until_ready(y)
    assert y.shape == (2, out_ch, 8, 8), y.shape
    assert bool(jnp.all(jnp.isfinite(y)))
    print("KERNEL_OK")
</pallas_src>

<mosaic_0001>
module attributes {stable_mosaic.version = 11 : i64} {
  func.func @_conv_stats_kernel(%arg0: i32, %arg1: memref<128x36xbf16, #tpu.memory_space<vmem>>, %arg2: memref<36x128xbf16, #tpu.memory_space<vmem>>, %arg3: memref<128x128xf32, #tpu.memory_space<vmem>>, %arg4: memref<1x2x128xf32, #tpu.memory_space<vmem>>) attributes {dimension_semantics = [#tpu.dimension_semantics<parallel>], iteration_bounds = array<i64: 1>, scalar_prefetch = 0 : i64, scratch_operands = 0 : i64, tpu.core_type = #tpu.core_type<tc>, window_params = [{transform_indices = @transform_0, window_bounds = array<i64: 128, 36>}, {pipeline_mode = #tpu.pipeline_mode<synchronous>, transform_indices = @transform_1, window_bounds = array<i64: 36, 128>}, {transform_indices = @transform_2, window_bounds = array<i64: 128, 128>}, {transform_indices = @transform_3, window_bounds = array<i64: 1, 2, 128>}]} {
    %c0 = arith.constant 0 : index
    %c0_0 = arith.constant 0 : index
    %0 = vector.load %arg1[%c0, %c0_0] : memref<128x36xbf16, #tpu.memory_space<vmem>>, vector<128x36xbf16>
    %c0_1 = arith.constant 0 : index
    %c0_2 = arith.constant 0 : index
    %1 = vector.load %arg2[%c0_1, %c0_2] : memref<36x128xbf16, #tpu.memory_space<vmem>>, vector<36x128xbf16>
    %cst = arith.constant dense<0.000000e+00> : vector<128x128xf32>
    %2 = tpu.matmul %0, %1, %cst {dimension_numbers = #tpu.dot_dimension_numbers<[1], [0], [0], [1], [0, 0, 1, 1], [], []>} : vector<128x36xbf16>, vector<36x128xbf16>, vector<128x128xf32> -> vector<128x128xf32>
    %c0_3 = arith.constant 0 : index
    %c0_4 = arith.constant 0 : index
    %3 = vector.load %arg3[%c0_3, %c0_4] : memref<128x128xf32, #tpu.memory_space<vmem>>, vector<128x128xf32>
    tpu.vector_store %arg3[%c0_3, %c0_4], %2 {strides = array<i32>} : memref<128x128xf32, #tpu.memory_space<vmem>>, vector<128x128xf32>,
    %cst_5 = arith.constant dense<0.000000e+00> : vector<128xf32>
    %4 = vector.multi_reduction <add>, %2, %cst_5 [0] : vector<128x128xf32> to vector<128xf32>
    %5 = vector.shape_cast %4 : vector<128xf32> to vector<1x128xf32>
    %6 = arith.mulf %2, %2 : vector<128x128xf32>
    %cst_6 = arith.constant dense<0.000000e+00> : vector<128xf32>
    %7 = vector.multi_reduction <add>, %6, %cst_6 [0] : vector<128x128xf32> to vector<128xf32>
    %8 = vector.shape_cast %7 : vector<128xf32> to vector<1x128xf32>
    %9 = tpu.concatenate %5, %8 in 0 : vector<1x128xf32>, vector<1x128xf32> -> vector<2x128xf32>
    %10 = vector.shape_cast %9 : vector<2x128xf32> to vector<1x2x128xf32>
    %c0_7 = arith.constant 0 : index
    %c0_8 = arith.constant 0 : index
    %c0_9 = arith.constant 0 : index
    %11 = vector.load %arg4[%c0_7, %c0_8, %c0_9] : memref<1x2x128xf32, #tpu.memory_space<vmem>>, vector<1x2x128xf32>
    tpu.vector_store %arg4[%c0_7, %c0_8, %c0_9], %10 {strides = array<i32>} : memref<1x2x128xf32, #tpu.memory_space<vmem>>, vector<1x2x128xf32>,
    return
  }
  func.func @transform_0(%arg0: i32) -> (i32, i32) {
    %c0_i32 = arith.constant 0 : i32
    %c0_i32_0 = arith.constant 0 : i32
    return %arg0, %c0_i32 : i32, i32
  }
  func.func @transform_1(%arg0: i32) -> (i32, i32) {
    %c0_i32 = arith.constant 0 : i32
    %c0_i32_0 = arith.constant 0 : i32
    %c0_i32_1 = arith.constant 0 : i32
    return %c0_i32, %c0_i32_0 : i32, i32
  }
  func.func @transform_2(%arg0: i32) -> (i32, i32) {
    %c0_i32 = arith.constant 0 : i32
    %c0_i32_0 = arith.constant 0 : i32
    return %arg0, %c0_i32 : i32, i32
  }
  func.func @transform_3(%arg0: i32) -> (i32, i32, i32) {
    %c0_i32 = arith.constant 0 : i32
    %c0_i32_0 = arith.constant 0 : i32
    %c0_i32_1 = arith.constant 0 : i32
    return %arg0, %c0_i32, %c0_i32_0 : i32, i32, i32
  }
}

module attributes {stable_mosaic.version = 11 : i64} {
  func.func @_bn_relu_kernel(%arg0: i32, %arg1: memref<128x128xf32, #tpu.memory_space<vmem>>, %arg2: memref<1x128xf32, #tpu.memory_space<vmem>>, %arg3: memref<1x128xf32, #tpu.memory_space<vmem>>, %arg4: memref<128x128xf32, #tpu.memory_space<vmem>>) attributes {dimension_semantics = [#tpu.dimension_semantics<parallel>], iteration_bounds = array<i64: 1>, scalar_prefetch = 0 : i64, scratch_operands = 0 : i64, tpu.core_type = #tpu.core_type<tc>, window_params = [{transform_indices = @transform_0, window_bounds = array<i64: 128, 128>}, {pipeline_mode = #tpu.pipeline_mode<synchronous>, transform_indices = @transform_1, window_bounds = array<i64: 1, 128>}, {pipeline_mode = #tpu.pipeline_mode<synchronous>, transform_indices = @transform_2, window_bounds = array<i64: 1, 128>}, {transform_indices = @transform_3, window_bounds = array<i64: 128, 128>}]} {
    %c0 = arith.constant 0 : index
    %c0_0 = arith.constant 0 : index
    %0 = vector.load %arg1[%c0, %c0_0] : memref<128x128xf32, #tpu.memory_space<vmem>>, vector<128x128xf32>
    %c0_1 = arith.constant 0 : index
    %c0_2 = arith.constant 0 : index
    %1 = vector.load %arg2[%c0_1, %c0_2] : memref<1x128xf32, #tpu.memory_space<vmem>>, vector<1x128xf32>
    %2 = vector.broadcast %1 : vector<1x128xf32> to vector<128x128xf32>
    %3 = arith.mulf %0, %2 : vector<128x128xf32>
    %c0_3 = arith.constant 0 : index
    %c0_4 = arith.constant 0 : index
    %4 = vector.load %arg3[%c0_3, %c0_4] : memref<1x128xf32, #tpu.memory_space<vmem>>, vector<1x128xf32>
    %5 = vector.broadcast %4 : vector<1x128xf32> to vector<128x128xf32>
    %6 = arith.addf %3, %5 : vector<128x128xf32>
    %cst = arith.constant 0.000000e+00 : f32
    %7 = vector.broadcast %cst : f32 to vector<128x128xf32>
    %8 = arith.maximumf %6, %7 : vector<128x128xf32>
    %c0_5 = arith.constant 0 : index
    %c0_6 = arith.constant 0 : index
    %9 = vector.load %arg4[%c0_5, %c0_6] : memref<128x128xf32, #tpu.memory_space<vmem>>, vector<128x128xf32>
    tpu.vector_store %arg4[%c0_5, %c0_6], %8 {strides = array<i32>} : memref<128x128xf32, #tpu.memory_space<vmem>>, vector<128x128xf32>,
    return
  }
  func.func @transform_0(%arg0: i32) -> (i32, i32) {
    %c0_i32 = arith.constant 0 : i32
    %c0_i32_0 = arith.constant 0 : i32
    return %arg0, %c0_i32 : i32, i32
  }
  func.func @transform_1(%arg0: i32) -> (i32, i32) {
    %c0_i32 = arith.constant 0 : i32
    %c0_i32_0 = arith.constant 0 : i32
    %c0_i32_1 = arith.constant 0 : i32
    return %c0_i32, %c0_i32_0 : i32, i32
  }
  func.func @transform_2(%arg0: i32) -> (i32, i32) {
    %c0_i32 = arith.constant 0 : i32
    %c0_i32_0 = arith.constant 0 : i32
    %c0_i32_1 = arith.constant 0 : i32
    return %c0_i32, %c0_i32_0 : i32, i32
  }
  func.func @transform_3(%arg0: i32) -> (i32, i32) {
    %c0_i32 = arith.constant 0 : i32
    %c0_i32_0 = arith.constant 0 : i32
    return %arg0, %c0_i32 : i32, i32
  }
}

</mosaic_0001>

<llo_original>
// kernel: double_conv2_2.3
$region0: #{double_conv2_2.3}
  #allocation0 [shape = 'u32[]', space=smem, size = 0x4, offset = 0x4, fixed_abs, tag = 'smem constant byte address 0x4 - core index']
  #allocation1 [shape = 'u32[144,128]{1,0:T(1,128)}', space=vmem, size = 0x12000, scoped, tag = 'internal scratch']
  %s0 = inlined_call_operand.vmem [shape: f32[128,128], index: 0, kind: input, shape index: {}]
  %s1 = inlined_call_operand.vmem [shape: f32[1,128], index: 1, kind: input, shape index: {}]
  %s2 = inlined_call_operand.vmem [shape: f32[1,128], index: 2, kind: input, shape index: {}]
  %s3 = inlined_call_operand.vmem [shape: f32[128,128], index: 3, kind: output, shape index: {}]
  %s4 = sld [smem:[#allocation0]]
  $region22: #{double_conv2_2.3} parent=0
    _
  %s6 = ssub.s32 1, %s4
  %s7 = scalar_select 0, %s6, %s4
  // Predicated region
  $region2: #{double_conv2_2.3} parent=0 // pred_check
    _
  $region3: #{double_conv2_2.3} parent=0 // pred_check_branch
    %9 = sbr.rel (0) target = $region5
  $region4: #{double_conv2_2.3} parent=0 // pred_region
    _
  $region5: #{double_conv2_2.3} parent=0 // pred_fallthru
    _
  // Predicated region
  $region6: #{double_conv2_2.3} parent=0 // pred_check
    _
  $region7: #{double_conv2_2.3} parent=0 // pred_check_branch
    %11 = sbr.rel (0) target = $region9
  $region8: #{double_conv2_2.3} parent=0 // pred_region
    _
  $region9: #{double_conv2_2.3} parent=0 // pred_fallthru
    _
  // Predicated region
  $region10: #{double_conv2_2.3} parent=0 // pred_check
    _
  $region11: #{double_conv2_2.3} parent=0 // pred_check_branch
    %13 = sbr.rel (0) target = $region13
  $region12: #{double_conv2_2.3} parent=0 // pred_region
    _
  $region13: #{double_conv2_2.3} parent=0 // pred_fallthru
    _
  %v14 = vld [vmem:[%s0] sm:$0xff]
  %v15 = vld [vmem:[%s0 + $0x8] sm:$0xff]
  %v16 = vld [vmem:[%s0 + $0x10] sm:$0xff]
  %v17 = vld [vmem:[%s0 + $0x18] sm:$0xff]
  %v18 = vld [vmem:[%s0 + $0x20] sm:$0xff]
  %v19 = vld [vmem:[%s0 + $0x28] sm:$0xff]
  %v20 = vld [vmem:[%s0 + $0x30] sm:$0xff]
  %v21 = vld [vmem:[%s0 + $0x38] sm:$0xff]
  %v22 = vld [vmem:[%s0 + $0x40] sm:$0xff]
  %v23 = vld [vmem:[%s0 + $0x48] sm:$0xff]
  %v24 = vld [vmem:[%s0 + $0x50] sm:$0xff]
  %v25 = vld [vmem:[%s0 + $0x58] sm:$0xff]
  %v26 = vld [vmem:[%s0 + $0x60] sm:$0xff]
  %v27 = vld [vmem:[%s0 + $0x68] sm:$0xff]
  %v28 = vld [vmem:[%s0 + $0x70] sm:$0xff]
  %v29 = vld [vmem:[%s0 + $0x78] sm:$0xff]
  %v30 = vld [vmem:[%s1] sm:$0x1]
  %v32 = vlaneseq
  %v33 = vshrl.u32 %v32, 7
  %v34 = vsub.s32 0, %v33
  %v35 = vrot.slane %v30, %v34
  %v37 = vmul.f32 %v14, %v35
  %v38 = vmul.f32 %v15, %v35
  %v39 = vmul.f32 %v16, %v35
  %v40 = vmul.f32 %v17, %v35
  %v41 = vmul.f32 %v18, %v35
  %v42 = vmul.f32 %v19, %v35
  %v43 = vmul.f32 %v20, %v35
  %v44 = vmul.f32 %v21, %v35
  %v45 = vmul.f32 %v22, %v35
  %v46 = vmul.f32 %v23, %v35
  %v47 = vmul.f32 %v24, %v35
  %v48 = vmul.f32 %v25, %v35
  %v49 = vmul.f32 %v26, %v35
  %v50 = vmul.f32 %v27, %v35
  %v51 = vmul.f32 %v28, %v35
  %v52 = vmul.f32 %v29, %v35
  %v53 = vld [vmem:[%s2] sm:$0x1]
  %v55 = vlaneseq
  %v56 = vshrl.u32 %v55, 7
  %v57 = vsub.s32 0, %v56
  %v58 = vrot.slane %v53, %v57
  %v60 = vadd.f32 %v37, %v58
  %v61 = vadd.f32 %v38, %v58
  %v62 = vadd.f32 %v39, %v58
  %v63 = vadd.f32 %v40, %v58
  %v64 = vadd.f32 %v41, %v58
  %v65 = vadd.f32 %v42, %v58
  %v66 = vadd.f32 %v43, %v58
  %v67 = vadd.f32 %v44, %v58
  %v68 = vadd.f32 %v45, %v58
  %v69 = vadd.f32 %v46, %v58
  %v70 = vadd.f32 %v47, %v58
  %v71 = vadd.f32 %v48, %v58
  %v72 = vadd.f32 %v49, %v58
  %v73 = vadd.f32 %v50, %v58
  %v74 = vadd.f32 %v51, %v58
  %v75 = vadd.f32 %v52, %v58
  %v76 = vmax.f32 %v60, 0.0
  %v77 = vmax.f32 %v61, 0.0
  %v78 = vmax.f32 %v62, 0.0
  %v79 = vmax.f32 %v63, 0.0
  %v80 = vmax.f32 %v64, 0.0
  %v81 = vmax.f32 %v65, 0.0
  %v82 = vmax.f32 %v66, 0.0
  %v83 = vmax.f32 %v67, 0.0
  %v84 = vmax.f32 %v68, 0.0
  %v85 = vmax.f32 %v69, 0.0
  %v86 = vmax.f32 %v70, 0.0
  %v87 = vmax.f32 %v71, 0.0
  %v88 = vmax.f32 %v72, 0.0
  %v89 = vmax.f32 %v73, 0.0
  %v90 = vmax.f32 %v74, 0.0
  %v91 = vmax.f32 %v75, 0.0
  %92 = vst [vmem:[%s3] sm:$0xff] %v76
  %93 = vst [vmem:[%s3 + $0x8] sm:$0xff] %v77
  %94 = vst [vmem:[%s3 + $0x10] sm:$0xff] %v78
  %95 = vst [vmem:[%s3 + $0x18] sm:$0xff] %v79
  %96 = vst [vmem:[%s3 + $0x20] sm:$0xff] %v80
  %97 = vst [vmem:[%s3 + $0x28] sm:$0xff] %v81
  %98 = vst [vmem:[%s3 + $0x30] sm:$0xff] %v82
  %99 = vst [vmem:[%s3 + $0x38] sm:$0xff] %v83
  %100 = vst [vmem:[%s3 + $0x40] sm:$0xff] %v84
  %101 = vst [vmem:[%s3 + $0x48] sm:$0xff] %v85
  %102 = vst [vmem:[%s3 + $0x50] sm:$0xff] %v86
  %103 = vst [vmem:[%s3 + $0x58] sm:$0xff] %v87
  %104 = vst [vmem:[%s3 + $0x60] sm:$0xff] %v88
  %105 = vst [vmem:[%s3 + $0x68] sm:$0xff] %v89
  %106 = vst [vmem:[%s3 + $0x70] sm:$0xff] %v90
  %107 = vst [vmem:[%s3 + $0x78] sm:$0xff] %v91
  // Predicated region
  $region14: #{double_conv2_2.3} parent=0 // pred_check
    _
  $region15: #{double_conv2_2.3} parent=0 // pred_check_branch
    %109 = sbr.rel (0) target = $region17
  $region16: #{double_conv2_2.3} parent=0 // pred_region
    _
  $region17: #{double_conv2_2.3} parent=0 // pred_fallthru
    _
  // Predicated region
  $region18: #{double_conv2_2.3} parent=0 // pred_check
    _
  $region19: #{double_conv2_2.3} parent=0 // pred_check_branch
    %111 = sbr.rel (0) target = $region21
  $region20: #{double_conv2_2.3} parent=0 // pred_region
    _
  $region21: #{double_conv2_2.3} parent=0 // pred_fallthru
    _

// kernel: double_conv2_2.2
$region0: #{double_conv2_2.2}
  #allocation0 [shape = 'u32[]', space=smem, size = 0x4, offset = 0x4, fixed_abs, tag = 'smem constant byte address 0x4 - core index']
  #allocation1 [shape = 'u32[144,128]{1,0:T(1,128)}', space=vmem, size = 0x12000, scoped, tag = 'internal scratch']
  %s0 = inlined_call_operand.vmem [shape: bf16[128,36], index: 0, kind: input, shape index: {}]
  %s1 = inlined_call_operand.vmem [shape: bf16[36,128], index: 1, kind: input, shape index: {}]
  %s2 = inlined_call_operand.vmem [shape: f32[128,128], index: 2, kind: output, shape index: {0}]
  %s3 = inlined_call_operand.vmem [shape: f32[1,2,128], index: 3, kind: output, shape index: {1}]
  %4 = xla_tuple %s2, %s3
  %s5 = sld [smem:[#allocation0]]
  $region26: #{double_conv2_2.2} parent=0
    _
  %s7 = ssub.s32 1, %s5
  %s8 = scalar_select 0, %s7, %s5
  // Predicated region
  $region2: #{double_conv2_2.2} parent=0 // pred_check
    _
  $region3: #{double_conv2_2.2} parent=0 // pred_check_branch
    %10 = sbr.rel (0) target = $region5
  $region4: #{double_conv2_2.2} parent=0 // pred_region
    _
  $region5: #{double_conv2_2.2} parent=0 // pred_fallthru
    _
  // Predicated region
  $region6: #{double_conv2_2.2} parent=0 // pred_check
    _
  $region7: #{double_conv2_2.2} parent=0 // pred_check_branch
    %12 = sbr.rel (0) target = $region9
  $region8: #{double_conv2_2.2} parent=0 // pred_region
    _
  $region9: #{double_conv2_2.2} parent=0 // pred_fallthru
    _
  %v14 = vld [vmem:[%s0] sm:$0xf]
  %v15 = vld [vmem:[%s0 + $0x4] sm:$0xf]
  %v16 = vld [vmem:[%s0 + $0x8] sm:$0xf]
  %v17 = vld [vmem:[%s0 + $0xc] sm:$0xf]
  %v18 = vld [vmem:[%s0 + $0x10] sm:$0xf]
  %v19 = vld [vmem:[%s0 + $0x14] sm:$0xf]
  %v20 = vld [vmem:[%s0 + $0x18] sm:$0xf]
  %v21 = vld [vmem:[%s0 + $0x1c] sm:$0xf]
  %v22 = vld [vmem:[%s0 + $0x20] sm:$0xf]
  %v23 = vld [vmem:[%s0 + $0x24] sm:$0xf]
  %v24 = vld [vmem:[%s0 + $0x28] sm:$0xf]
  %v25 = vld [vmem:[%s0 + $0x2c] sm:$0xf]
  %v26 = vld [vmem:[%s0 + $0x30] sm:$0xf]
  %v27 = vld [vmem:[%s0 + $0x34] sm:$0xf]
  %v28 = vld [vmem:[%s0 + $0x38] sm:$0xf]
  %v29 = vld [vmem:[%s0 + $0x3c] sm:$0xf]
  %v30 = vld [vmem:[%s1] sm:$0xf]
  %v31 = vld [vmem:[%s1 + $0x4] sm:$0xf]
  %v32 = vld [vmem:[%s1 + $0x8] sm:$0xf]
  %v33 = vld [vmem:[%s1 + $0xc] sm:$0xf]
  %v34 = vld [vmem:[%s1 + $0x10] sm:$0x3]
  %v51 = vunpack.c.l.b16 %v14
  %v52 = vunpack.c.l.b16 %v15
  %v53 = vunpack.c.l.b16 %v16
  %v54 = vunpack.c.l.b16 %v17
  %v55 = vunpack.c.l.b16 %v18
  %v56 = vunpack.c.l.b16 %v19
  %v57 = vunpack.c.l.b16 %v20
  %v58 = vunpack.c.l.b16 %v21
  %v59 = vunpack.c.l.b16 %v22
  %v60 = vunpack.c.l.b16 %v23
  %v61 = vunpack.c.l.b16 %v24
  %v62 = vunpack.c.l.b16 %v25
  %v63 = vunpack.c.l.b16 %v26
  %v64 = vunpack.c.l.b16 %v27
  %v65 = vunpack.c.l.b16 %v28
  %v66 = vunpack.c.l.b16 %v29
  %v67 = vpack.c.b16 %v52, %v51
  %v68 = vpack.c.b16 %v54, %v53
  %v69 = vpack.c.b16 %v56, %v55
  %v70 = vpack.c.b16 %v58, %v57
  %v71 = vpack.c.b16 %v60, %v59
  %v72 = vpack.c.b16 %v62, %v61
  %v73 = vpack.c.b16 %v64, %v63
  %v74 = vpack.c.b16 %v66, %v65
  %v80 = vunpack.c.l.b16 %v30
  %v81 = vunpack.c.l.b16 %v31
  %v82 = vunpack.c.l.b16 %v32
  %v83 = vunpack.c.l.b16 %v33
  %v84 = vunpack.c.l.b16 %v34
  %v85 = vpack.c.b16 %v81, %v80
  %v86 = vpack.c.b16 %v83, %v82
  %v87 = vpack.c.b16 %v84, %v84
  %vm90 = vcmask 293888
  %v92 = vsel %vm90, %v67, 0
  %v95 = vsel %vm90, %v68, 0
  %v98 = vsel %vm90, %v69, 0
  %v101 = vsel %vm90, %v70, 0
  %v104 = vsel %vm90, %v71, 0
  %v107 = vsel %vm90, %v72, 0
  %v110 = vsel %vm90, %v73, 0
  %v113 = vsel %vm90, %v74, 0
  %vm115 = vcmask 1041408
  %v117 = vsel %vm115, %v87, 0
  %119 = vmatprep.subr.bf16.mxu0 0
  %120 = vmatpush1.bf16.msra.mxu0 %v85
  %121 = vmatprep.subr.bf16.mxu0 0
  %122 = vmatpush1.bf16.msra.mxu0 %v86
  %123 = vmatprep.subr.bf16.mxu0 0
  %124 = vmatpush1.bf16.msra.mxu0 %v117
  %125 = vmatprep.subr.bf16.mxu0 0
  %126 = vmatpush1.bf16.msra.mxu0 0
  %127 = vmatprep.subr.bf16.mxu0 0
  %128 = vmatpush1.bf16.msra.mxu0 0
  %129 = vmatprep.subr.bf16.mxu0 0
  %130 = vmatpush1.bf16.msra.mxu0 0
  %131 = vmatprep.subr.bf16.mxu0 0
  %132 = vmatpush1.bf16.msra.mxu0 0
  %133 = vmatprep.subr.bf16.mxu0 0
  %134 = vmatpush1.bf16.msra.mxu0 0
  %135 = vmatprep.subr.bf16.mxu0 0
  %136 = vmatpush1.bf16.msra.mxu0 0
  %137 = vmatprep.subr.bf16.mxu0 0
  %138 = vmatpush1.bf16.msra.mxu0 0
  %139 = vmatprep.subr.bf16.mxu0 0
  %140 = vmatpush1.bf16.msra.mxu0 0
  %141 = vmatprep.subr.bf16.mxu0 0
  %142 = vmatpush1.bf16.msra.mxu0 0
  %143 = vmatprep.subr.bf16.mxu0 0
  %144 = vmatpush1.bf16.msra.mxu0 0
  %145 = vmatprep.subr.bf16.mxu0 0
  %146 = vmatpush1.bf16.msra.mxu0 0
  %147 = vmatprep.subr.bf16.mxu0 0
  %148 = vmatpush1.bf16.msra.mxu0 0
  %149 = vmatprep.subr.bf16.mxu0 0
  %150 = vmatpush1.bf16.msra.mxu0 0
  %151 = vmatprep.mubr.bf16.mxu0 0
  %152 = vmatmul.mubr.bf16.gmra.mrb[0].mxu0 %v92
  %v153 = vpop.f32.mrb[0].mxu0
  %v154 = vadd.f32 0.0, %v153
  %v155 = vpop.f32.mrb[0].mxu0
  %v156 = vpop.f32.mrb[0].mxu0
  %v157 = vadd.f32 0.0, %v156
  %v158 = vpop.f32.mrb[0].mxu0
  %159 = vmatprep.mubr.bf16.mxu0 0
  %160 = vmatmul.mubr.bf16.gmra.mrb[0].mxu0 %v95
  %v161 = vpop.f32.mrb[0].mxu0
  %v162 = vadd.f32 0.0, %v161
  %v163 = vpop.f32.mrb[0].mxu0
  %v164 = vpop.f32.mrb[0].mxu0
  %v165 = vadd.f32 0.0, %v164
  %v166 = vpop.f32.mrb[0].mxu0
  %167 = vmatprep.mubr.bf16.mxu0 0
  %168 = vmatmul.mubr.bf16.gmra.mrb[0].mxu0 %v98
  %v169 = vpop.f32.mrb[0].mxu0
  %v170 = vadd.f32 0.0, %v169
  %v171 = vpop.f32.mrb[0].mxu0
  %v172 = vpop.f32.mrb[0].mxu0
  %v173 = vadd.f32 0.0, %v172
  %v174 = vpop.f32.mrb[0].mxu0
  %175 = vmatprep.mubr.bf16.mxu0 0
  %176 = vmatmul.mubr.bf16.gmra.mrb[0].mxu0 %v101
  %v177 = vpop.f32.mrb[0].mxu0
  %v178 = vadd.f32 0.0, %v177
  %v179 = vpop.f32.mrb[0].mxu0
  %v180 = vpop.f32.mrb[0].mxu0
  %v181 = vadd.f32 0.0, %v180
  %v182 = vpop.f32.mrb[0].mxu0
  %183 = vmatprep.mubr.bf16.mxu0 0
  %184 = vmatmul.mubr.bf16.gmra.mrb[0].mxu0 %v104
  %v185 = vpop.f32.mrb[0].mxu0
  %v186 = vadd.f32 0.0, %v185
  %v187 = vpop.f32.mrb[0].mxu0
  %v188 = vpop.f32.mrb[0].mxu0
  %v189 = vadd.f32 0.0, %v188
  %v190 = vpop.f32.mrb[0].mxu0
  %191 = vmatprep.mubr.bf16.mxu0 0
  %192 = vmatmul.mubr.bf16.gmra.mrb[0].mxu0 %v107
  %v193 = vpop.f32.mrb[0].mxu0
  %v194 = vadd.f32 0.0, %v193
  %v195 = vpop.f32.mrb[0].mxu0
  %v196 = vpop.f32.mrb[0].mxu0
  %v197 = vadd.f32 0.0, %v196
  %v198 = vpop.f32.mrb[0].mxu0
  %199 = vmatprep.mubr.bf16.mxu0 0
  %200 = vmatmul.mubr.bf16.gmra.mrb[0].mxu0 %v110
  %v201 = vpop.f32.mrb[0].mxu0
  %v202 = vadd.f32 0.0, %v201
  %v203 = vpop.f32.mrb[0].mxu0
  %v204 = vpop.f32.mrb[0].mxu0
  %v205 = vadd.f32 0.0, %v204
  %v206 = vpop.f32.mrb[0].mxu0
  %207 = vmatprep.mubr.bf16.mxu0 0
  %208 = vmatmul.mubr.bf16.gmra.mrb[0].mxu0 %v113
  %v209 = vpop.f32.mrb[0].mxu0
  %v210 = vadd.f32 0.0, %v209
  %v211 = vpop.f32.mrb[0].mxu0
  %v212 = vpop.f32.mrb[0].mxu0
  %v213 = vadd.f32 0.0, %v212
  %v214 = vpop.f32.mrb[0].mxu0
  %215 = vdwg.mxu0
  %216 = vst [vmem:[%s2] sm:$0xff] %v154
  %217 = vst [vmem:[%s2 + $0x8] sm:$0xff] %v157
  %218 = vst [vmem:[%s2 + $0x10] sm:$0xff] %v162
  %219 = vst [vmem:[%s2 + $0x18] sm:$0xff] %v165
  %220 = vst [vmem:[%s2 + $0x20] sm:$0xff] %v170
  %221 = vst [vmem:[%s2 + $0x28] sm:$0xff] %v173
  %222 = vst [vmem:[%s2 + $0x30] sm:$0xff] %v178
  %223 = vst [vmem:[%s2 + $0x38] sm:$0xff] %v181
  %224 = vst [vmem:[%s2 + $0x40] sm:$0xff] %v186
  %225 = vst [vmem:[%s2 + $0x48] sm:$0xff] %v189
  %226 = vst [vmem:[%s2 + $0x50] sm:$0xff] %v194
  %227 = vst [vmem:[%s2 + $0x58] sm:$0xff] %v197
  %228 = vst [vmem:[%s2 + $0x60] sm:$0xff] %v202
  %229 = vst [vmem:[%s2 + $0x68] sm:$0xff] %v205
  %230 = vst [vmem:[%s2 + $0x70] sm:$0xff] %v210
  %231 = vst [vmem:[%s2 + $0x78] sm:$0xff] %v213
  %v232 = vadd.f32 %v154, %v157
  %v233 = vadd.f32 %v232, %v162
  %v234 = vadd.f32 %v233, %v165
  %v235 = vadd.f32 %v234, %v170
  %v236 = vadd.f32 %v235, %v173
  %v237 = vadd.f32 %v236, %v178
  %v238 = vadd.f32 %v237, %v181
  %v239 = vadd.f32 %v238, %v186
  %v240 = vadd.f32 %v239, %v189
  %v241 = vadd.f32 %v240, %v194
  %v242 = vadd.f32 %v241, %v197
  %v243 = vadd.f32 %v242, %v202
  %v244 = vadd.f32 %v243, %v205
  %v245 = vadd.f32 %v244, %v210
  %v246 = vadd.f32 %v245, %v213
  %v247 = vrot.slane %v246, 4
  %v248 = vadd.f32 %v246, %v247
  %v249 = vrot.slane %v248, 2
  %v250 = vadd.f32 %v248, %v249
  %v251 = vrot.slane %v250, 1
  %v252 = vadd.f32 %v250, %v251
  %v253 = vmul.f32 %v154, %v154
  %v254 = vmul.f32 %v157, %v157
  %v255 = vmul.f32 %v162, %v162
  %v256 = vmul.f32 %v165, %v165
  %v257 = vmul.f32 %v170, %v170
  %v258 = vmul.f32 %v173, %v173
  %v259 = vmul.f32 %v178, %v178
  %v260 = vmul.f32 %v181, %v181
  %v261 = vmul.f32 %v186, %v186
  %v262 = vmul.f32 %v189, %v189
  %v263 = vmul.f32 %v194, %v194
  %v264 = vmul.f32 %v197, %v197
  %v265 = vmul.f32 %v202, %v202
  %v266 = vmul.f32 %v205, %v205
  %v267 = vmul.f32 %v210, %v210
  %v268 = vmul.f32 %v213, %v213
  %v269 = vadd.f32 %v253, %v254
  %v270 = vadd.f32 %v269, %v255
  %v271 = vadd.f32 %v270, %v256
  %v272 = vadd.f32 %v271, %v257
  %v273 = vadd.f32 %v272, %v258
  %v274 = vadd.f32 %v273, %v259
  %v275 = vadd.f32 %v274, %v260
  %v276 = vadd.f32 %v275, %v261
  %v277 = vadd.f32 %v276, %v262
  %v278 = vadd.f32 %v277, %v263
  %v279 = vadd.f32 %v278, %v264
  %v280 = vadd.f32 %v279, %v265
  %v281 = vadd.f32 %v280, %v266
  %v282 = vadd.f32 %v281, %v267
  %v283 = vadd.f32 %v282, %v268
  %v284 = vrot.slane %v283, 4
  %v285 = vadd.f32 %v283, %v284
  %v286 = vrot.slane %v285, 2
  %v287 = vadd.f32 %v285, %v286
  %v288 = vrot.slane %v287, 1
  %v289 = vadd.f32 %v287, %v288
  %vm290 = vcmask 1040384
  %v291 = vsel %vm290, %v252, %v289
  %292 = vst [vmem:[%s3] sm:$0x3] %v291
  // Predicated region
  $region10: #{double_conv2_2.2} parent=0 // pred_check
    _
  $region11: #{double_conv2_2.2} parent=0 // pred_check_branch
    %294 = sbr.rel (0) target = $region13
  $region12: #{double_conv2_2.2} parent=0 // pred_region
    _
  $region13: #{double_conv2_2.2} parent=0 // pred_fallthru
    _
  // Predicated region
  $region14: #{double_conv2_2.2} parent=0 // pred_check
    _
  $region15: #{double_conv2_2.2} parent=0 // pred_check_branch
    %296 = sbr.rel (0) target = $region17
  $region16: #{double_conv2_2.2} parent=0 // pred_region
    _
  $region17: #{double_conv2_2.2} parent=0 // pred_fallthru
    _
  // Predicated region
  $region18: #{double_conv2_2.2} parent=0 // pred_check
    _
  $region19: #{double_conv2_2.2} parent=0 // pred_check_branch
    %298 = sbr.rel (0) target = $region21
  $region20: #{double_conv2_2.2} parent=0 // pred_region
    _
  $region21: #{double_conv2_2.2} parent=0 // pred_fallthru
    _
  // Predicated region
  $region22: #{double_conv2_2.2} parent=0 // pred_check
    _
  $region23: #{double_conv2_2.2} parent=0 // pred_check_branch
    %300 = sbr.rel (0) target = $region25
  $region24: #{double_conv2_2.2} parent=0 // pred_region
    _
  $region25: #{double_conv2_2.2} parent=0 // pred_fallthru
    _

</llo_original>
